<compile_context>
chip_gen: v5e
topology: v5e:2x2
jax: 0.10.0
libtpu: 0.0.40
codegen_flags: <defaults>
</compile_context>

<pallas_src>
import functools

import jax
import jax.numpy as jnp
from jax.experimental import pallas as pl
from jax.experimental.pallas import tpu as pltpu


def _residual_block_kernel(alpha_ref, mask_ref, x_ref, w_ref, b_ref, o_ref,
                           tap_ref, *, H, W, C, Cpad):
    # alpha_ref: (1,) SMEM                 PReLU slope
    # mask_ref : (4, HW) VMEM              {0,1} border masks (shared, tiny)
    # x_ref    : (1, C, HW) VMEM           one batch element, NCHW flattened
    # w_ref    : (Cout, 9*Cpad) VMEM       im2col-fused conv weights
    # b_ref    : (Cout, 1) VMEM            conv bias
    # o_ref    : (1, C, HW) VMEM
    # tap_ref  : (9*Cpad, HW) VMEM scratch im2col tap buffer
    HW = H * W
    xf = x_ref[0].astype(jnp.float32)            # (C, HW) — only read of input

    # Elementary border masks at (1, HW); identical across channels, so they
    # are combined per tap at (1, HW) and broadcast by a single multiply.
    not_top = mask_ref[0:1, :]
    not_bot = mask_ref[1:2, :]
    not_left = mask_ref[2:3, :]
    not_right = mask_ref[3:4, :]
    vert = {-1: not_top, 0: None, 1: not_bot}
    horz = {-1: not_left, 0: None, 1: not_right}

    # Zero the Cin padding rows of the im2col scratch (only when C % 8 != 0).
    # Done unconditionally per step so it is safe under multi-core sharding.
    if Cpad != C:
        zpad = jnp.zeros((Cpad - C, HW), jnp.float32)
        for t in range(9):
            tap_ref[t * Cpad + C:(t + 1) * Cpad, :] = zpad

    # Build the 9 shifted+masked taps of the 3x3 "same" conv into the scratch:
    # tap t=(dh+1)*3+(dw+1) occupies rows [t*Cpad, t*Cpad+C) and holds
    # x[ci, p + dh*W + dw] (0 where the neighbour falls outside the image).
    for dh in (-1, 0, 1):
        for dw in (-1, 0, 1):
            t = (dh + 1) * 3 + (dw + 1)
            off = dh * W + dw
            if off == 0:
                tap = xf
            else:
                # shifted[p] = x[(p + off) mod HW]; wrapped reads masked below.
                shifted = pltpu.roll(xf, shift=(-off) % HW, axis=1)   # XLU
                mv, mh = vert[dh], horz[dw]
                m = mv if mh is None else (mh if mv is None else mv * mh)
                tap = shifted * m                 # (C,HW) * (1,HW) broadcast
            tap_ref[t * Cpad:t * Cpad + C, :] = tap

    # Single fused MXU dot: (Cout, 9*Cpad) @ (9*Cpad, HW) -> f32 (Cout, HW).
    acc = jnp.dot(w_ref[...], tap_ref[...], preferred_element_type=jnp.float32)
    acc = acc + b_ref[...]                        # bias once, after the dot

    alpha = alpha_ref[0]
    act = jnp.where(acc > 0, acc, alpha * acc)    # PReLU, scalar alpha
    o_ref[0] = (xf + act).astype(o_ref.dtype)     # residual add


def residual_block_layer(x_nchw, w_oihw, bias, alpha):
    """x_nchw: (B, C, H, W) f32; w_oihw: (C, C, 3, 3) (PyTorch OIHW); bias: (C,)."""
    B, C, H, W = x_nchw.shape
    HW = H * W
    Cpad = ((C + 7) // 8) * 8                     # pad Cin to a sublane multiple

    x_flat = x_nchw.reshape(B, C, HW)             # contiguous — free

    # Weights: OIHW -> (Cout, 9*Cpad); columns ordered tap-major then Cin,
    # matching the scratch row layout used in the kernel.
    w_pad = jnp.pad(w_oihw.astype(jnp.float32),
                    ((0, 0), (0, Cpad - C), (0, 0), (0, 0)))   # (C, Cpad, 3, 3)
    w_2d = jnp.transpose(w_pad, (0, 2, 3, 1)).reshape(C, 9 * Cpad)

    b2d = bias.reshape(C, 1).astype(jnp.float32)
    alpha_arr = jnp.asarray(alpha, jnp.float32).reshape(1)

    # Elementary border masks for the 3x3 halo: [row>=1, row<H-1, col>=1,
    # col<W-1] as {0,1} f32, shape (4, HW).  Exact for any H, W (no float
    # reciprocal trick) and fetched once (constant block index).
    pos = jnp.arange(HW, dtype=jnp.int32)
    row = pos // W
    col = pos % W
    masks = jnp.stack([row >= 1, row < H - 1, col >= 1, col < W - 1]
                      ).astype(jnp.float32)                    # (4, HW)

    kernel = functools.partial(_residual_block_kernel, H=H, W=W, C=C, Cpad=Cpad)

    out_flat = pl.pallas_call(
        kernel,
        out_shape=jax.ShapeDtypeStruct((B, C, HW), x_nchw.dtype),
        grid=(B,),
        in_specs=[
            pl.BlockSpec(memory_space=pltpu.MemorySpace.SMEM),       # alpha
            pl.BlockSpec((4, HW), lambda b: (0, 0)),                 # masks
            pl.BlockSpec((1, C, HW), lambda b: (b, 0, 0)),           # x
            pl.BlockSpec((C, 9 * Cpad), lambda b: (0, 0)),           # weights
            pl.BlockSpec((C, 1), lambda b: (0, 0)),                  # bias
        ],
        out_specs=pl.BlockSpec((1, C, HW), lambda b: (b, 0, 0)),
        scratch_shapes=[pltpu.VMEM((9 * Cpad, HW), jnp.float32)],    # im2col
        compiler_params=pltpu.CompilerParams(
            dimension_semantics=("parallel",),
            vmem_limit_bytes=32 * 1024 * 1024),
    )(alpha_arr, masks, x_flat, w_2d, b2d)

    return out_flat.reshape(B, C, H, W)


if __name__ == "__main__":
    B, C, H, W = 2, 4, 16, 16
    alpha = 0.1

    key = jax.random.PRNGKey(0)
    kx, kw, kb = jax.random.split(key, 3)
    x = jax.random.normal(kx, (B, C, H, W), dtype=jnp.float32)
    # Conv2d(C, C, 3) weights in PyTorch OIHW layout, deterministic init.
    w = jax.random.normal(kw, (C, C, 3, 3), dtype=jnp.float32) * 0.1
    b = jax.random.normal(kb, (C,), dtype=jnp.float32) * 0.1

    out = residual_block_layer(x, w, b, alpha)
    out = jax.block_until_ready(out)

    # Pure-JAX reference (NCHW conv, same padding) to validate semantics.
    conv_ref = jax.lax.conv_general_dilated(
        x, w, window_strides=(1, 1), padding="SAME",
        dimension_numbers=("NCHW", "OIHW", "NCHW")) + b.reshape(1, C, 1, 1)
    ref = x + jnp.where(conv_ref > 0, conv_ref, alpha * conv_ref)

    assert out.shape == (B, C, H, W)
    assert jnp.allclose(out, ref, atol=1e-4, rtol=1e-4), "mismatch vs reference"
    print("KERNEL_OK")
</pallas_src>

<mosaic_0001>
module attributes {stable_mosaic.version = 11 : i64} {
  func.func @_residual_block_kernel(%arg0: i32, %arg1: memref<1xf32, #tpu.memory_space<smem>>, %arg2: memref<4x256xf32, #tpu.memory_space<vmem>>, %arg3: memref<1x4x256xf32, #tpu.memory_space<vmem>>, %arg4: memref<4x72xf32, #tpu.memory_space<vmem>>, %arg5: memref<4x1xf32, #tpu.memory_space<vmem>>, %arg6: memref<1x4x256xf32, #tpu.memory_space<vmem>>, %arg7: memref<72x256xf32, #tpu.memory_space<vmem>>) attributes {dimension_semantics = [#tpu.dimension_semantics<parallel>], iteration_bounds = array<i64: 2>, scalar_prefetch = 0 : i64, scratch_operands = 1 : i64, tpu.core_type = #tpu.core_type<tc>, window_params = [{transform_indices = @transform_0, window_bounds = array<i64: 1>}, {pipeline_mode = #tpu.pipeline_mode<synchronous>, transform_indices = @transform_1, window_bounds = array<i64: 4, 256>}, {transform_indices = @transform_2, window_bounds = array<i64: 1, 4, 256>}, {pipeline_mode = #tpu.pipeline_mode<synchronous>, transform_indices = @transform_3, window_bounds = array<i64: 4, 72>}, {pipeline_mode = #tpu.pipeline_mode<synchronous>, transform_indices = @transform_4, window_bounds = array<i64: 4, 1>}, {transform_indices = @transform_5, window_bounds = array<i64: 1, 4, 256>}]} {
    %c0 = arith.constant 0 : index
    %c0_0 = arith.constant 0 : index
    %c0_1 = arith.constant 0 : index
    %0 = vector.load %arg3[%c0, %c0_0, %c0_1] : memref<1x4x256xf32, #tpu.memory_space<vmem>>, vector<1x4x256xf32>
    %1 = vector.shape_cast %0 : vector<1x4x256xf32> to vector<4x256xf32>
    %c0_2 = arith.constant 0 : index
    %c0_3 = arith.constant 0 : index
    %2 = vector.load %arg2[%c0_2, %c0_3] : memref<4x256xf32, #tpu.memory_space<vmem>>, vector<1x256xf32>
    %c1 = arith.constant 1 : index
    %c0_4 = arith.constant 0 : index
    %3 = vector.load %arg2[%c1, %c0_4] : memref<4x256xf32, #tpu.memory_space<vmem>>, vector<1x256xf32>
    %c2 = arith.constant 2 : index
    %c0_5 = arith.constant 0 : index
    %4 = vector.load %arg2[%c2, %c0_5] : memref<4x256xf32, #tpu.memory_space<vmem>>, vector<1x256xf32>
    %c3 = arith.constant 3 : index
    %c0_6 = arith.constant 0 : index
    %5 = vector.load %arg2[%c3, %c0_6] : memref<4x256xf32, #tpu.memory_space<vmem>>, vector<1x256xf32>
    %cst = arith.constant 0.000000e+00 : f32
    %6 = vector.broadcast %cst : f32 to vector<4x256xf32>
    %c4 = arith.constant 4 : index
    %c0_7 = arith.constant 0 : index
    %7 = vector.load %arg7[%c4, %c0_7] : memref<72x256xf32, #tpu.memory_space<vmem>>, vector<4x256xf32>
    tpu.vector_store %arg7[%c4, %c0_7], %6 {strides = array<i32>} : memref<72x256xf32, #tpu.memory_space<vmem>>, vector<4x256xf32>,
    %c12 = arith.constant 12 : index
    %c0_8 = arith.constant 0 : index
    %8 = vector.load %arg7[%c12, %c0_8] : memref<72x256xf32, #tpu.memory_space<vmem>>, vector<4x256xf32>
    tpu.vector_store %arg7[%c12, %c0_8], %6 {strides = array<i32>} : memref<72x256xf32, #tpu.memory_space<vmem>>, vector<4x256xf32>,
    %c20 = arith.constant 20 : index
    %c0_9 = arith.constant 0 : index
    %9 = vector.load %arg7[%c20, %c0_9] : memref<72x256xf32, #tpu.memory_space<vmem>>, vector<4x256xf32>
    tpu.vector_store %arg7[%c20, %c0_9], %6 {strides = array<i32>} : memref<72x256xf32, #tpu.memory_space<vmem>>, vector<4x256xf32>,
    %c28 = arith.constant 28 : index
    %c0_10 = arith.constant 0 : index
    %10 = vector.load %arg7[%c28, %c0_10] : memref<72x256xf32, #tpu.memory_space<vmem>>, vector<4x256xf32>
    tpu.vector_store %arg7[%c28, %c0_10], %6 {strides = array<i32>} : memref<72x256xf32, #tpu.memory_space<vmem>>, vector<4x256xf32>,
    %c36 = arith.constant 36 : index
    %c0_11 = arith.constant 0 : index
    %11 = vector.load %arg7[%c36, %c0_11] : memref<72x256xf32, #tpu.memory_space<vmem>>, vector<4x256xf32>
    tpu.vector_store %arg7[%c36, %c0_11], %6 {strides = array<i32>} : memref<72x256xf32, #tpu.memory_space<vmem>>, vector<4x256xf32>,
    %c44 = arith.constant 44 : index
    %c0_12 = arith.constant 0 : index
    %12 = vector.load %arg7[%c44, %c0_12] : memref<72x256xf32, #tpu.memory_space<vmem>>, vector<4x256xf32>
    tpu.vector_store %arg7[%c44, %c0_12], %6 {strides = array<i32>} : memref<72x256xf32, #tpu.memory_space<vmem>>, vector<4x256xf32>,
    %c52 = arith.constant 52 : index
    %c0_13 = arith.constant 0 : index
    %13 = vector.load %arg7[%c52, %c0_13] : memref<72x256xf32, #tpu.memory_space<vmem>>, vector<4x256xf32>
    tpu.vector_store %arg7[%c52, %c0_13], %6 {strides = array<i32>} : memref<72x256xf32, #tpu.memory_space<vmem>>, vector<4x256xf32>,
    %c60 = arith.constant 60 : index
    %c0_14 = arith.constant 0 : index
    %14 = vector.load %arg7[%c60, %c0_14] : memref<72x256xf32, #tpu.memory_space<vmem>>, vector<4x256xf32>
    tpu.vector_store %arg7[%c60, %c0_14], %6 {strides = array<i32>} : memref<72x256xf32, #tpu.memory_space<vmem>>, vector<4x256xf32>,
    %c68 = arith.constant 68 : index
    %c0_15 = arith.constant 0 : index
    %15 = vector.load %arg7[%c68, %c0_15] : memref<72x256xf32, #tpu.memory_space<vmem>>, vector<4x256xf32>
    tpu.vector_store %arg7[%c68, %c0_15], %6 {strides = array<i32>} : memref<72x256xf32, #tpu.memory_space<vmem>>, vector<4x256xf32>,
    %c17_i32 = arith.constant 17 : i32
    %16 = tpu.dynamic_rotate %1 by %c17_i32 dim 1 : vector<4x256xf32>, i32 -> vector<4x256xf32>
    %17 = arith.mulf %2, %4 : vector<1x256xf32>
    %18 = vector.broadcast %17 : vector<1x256xf32> to vector<4x256xf32>
    %19 = arith.mulf %16, %18 : vector<4x256xf32>
    %c0_16 = arith.constant 0 : index
    %c0_17 = arith.constant 0 : index
    %20 = vector.load %arg7[%c0_16, %c0_17] : memref<72x256xf32, #tpu.memory_space<vmem>>, vector<4x256xf32>
    tpu.vector_store %arg7[%c0_16, %c0_17], %19 {strides = array<i32>} : memref<72x256xf32, #tpu.memory_space<vmem>>, vector<4x256xf32>,
    %c16_i32 = arith.constant 16 : i32
    %21 = tpu.dynamic_rotate %1 by %c16_i32 dim 1 : vector<4x256xf32>, i32 -> vector<4x256xf32>
    %22 = vector.broadcast %2 : vector<1x256xf32> to vector<4x256xf32>
    %23 = arith.mulf %21, %22 : vector<4x256xf32>
    %c8 = arith.constant 8 : index
    %c0_18 = arith.constant 0 : index
    %24 = vector.load %arg7[%c8, %c0_18] : memref<72x256xf32, #tpu.memory_space<vmem>>, vector<4x256xf32>
    tpu.vector_store %arg7[%c8, %c0_18], %23 {strides = array<i32>} : memref<72x256xf32, #tpu.memory_space<vmem>>, vector<4x256xf32>,
    %c15_i32 = arith.constant 15 : i32
    %25 = tpu.dynamic_rotate %1 by %c15_i32 dim 1 : vector<4x256xf32>, i32 -> vector<4x256xf32>
    %26 = arith.mulf %2, %5 : vector<1x256xf32>
    %27 = vector.broadcast %26 : vector<1x256xf32> to vector<4x256xf32>
    %28 = arith.mulf %25, %27 : vector<4x256xf32>
    %c16 = arith.constant 16 : index
    %c0_19 = arith.constant 0 : index
    %29 = vector.load %arg7[%c16, %c0_19] : memref<72x256xf32, #tpu.memory_space<vmem>>, vector<4x256xf32>
    tpu.vector_store %arg7[%c16, %c0_19], %28 {strides = array<i32>} : memref<72x256xf32, #tpu.memory_space<vmem>>, vector<4x256xf32>,
    %c1_i32 = arith.constant 1 : i32
    %30 = tpu.dynamic_rotate %1 by %c1_i32 dim 1 : vector<4x256xf32>, i32 -> vector<4x256xf32>
    %31 = vector.broadcast %4 : vector<1x256xf32> to vector<4x256xf32>
    %32 = arith.mulf %30, %31 : vector<4x256xf32>
    %c24 = arith.constant 24 : index
    %c0_20 = arith.constant 0 : index
    %33 = vector.load %arg7[%c24, %c0_20] : memref<72x256xf32, #tpu.memory_space<vmem>>, vector<4x256xf32>
    tpu.vector_store %arg7[%c24, %c0_20], %32 {strides = array<i32>} : memref<72x256xf32, #tpu.memory_space<vmem>>, vector<4x256xf32>,
    %c32 = arith.constant 32 : index
    %c0_21 = arith.constant 0 : index
    %34 = vector.load %arg7[%c32, %c0_21] : memref<72x256xf32, #tpu.memory_space<vmem>>, vector<4x256xf32>
    tpu.vector_store %arg7[%c32, %c0_21], %1 {strides = array<i32>} : memref<72x256xf32, #tpu.memory_space<vmem>>, vector<4x256xf32>,
    %c255_i32 = arith.constant 255 : i32
    %35 = tpu.dynamic_rotate %1 by %c255_i32 dim 1 : vector<4x256xf32>, i32 -> vector<4x256xf32>
    %36 = vector.broadcast %5 : vector<1x256xf32> to vector<4x256xf32>
    %37 = arith.mulf %35, %36 : vector<4x256xf32>
    %c40 = arith.constant 40 : index
    %c0_22 = arith.constant 0 : index
    %38 = vector.load %arg7[%c40, %c0_22] : memref<72x256xf32, #tpu.memory_space<vmem>>, vector<4x256xf32>
    tpu.vector_store %arg7[%c40, %c0_22], %37 {strides = array<i32>} : memref<72x256xf32, #tpu.memory_space<vmem>>, vector<4x256xf32>,
    %c241_i32 = arith.constant 241 : i32
    %39 = tpu.dynamic_rotate %1 by %c241_i32 dim 1 : vector<4x256xf32>, i32 -> vector<4x256xf32>
    %40 = arith.mulf %3, %4 : vector<1x256xf32>
    %41 = vector.broadcast %40 : vector<1x256xf32> to vector<4x256xf32>
    %42 = arith.mulf %39, %41 : vector<4x256xf32>
    %c48 = arith.constant 48 : index
    %c0_23 = arith.constant 0 : index
    %43 = vector.load %arg7[%c48, %c0_23] : memref<72x256xf32, #tpu.memory_space<vmem>>, vector<4x256xf32>
    tpu.vector_store %arg7[%c48, %c0_23], %42 {strides = array<i32>} : memref<72x256xf32, #tpu.memory_space<vmem>>, vector<4x256xf32>,
    %c240_i32 = arith.constant 240 : i32
    %44 = tpu.dynamic_rotate %1 by %c240_i32 dim 1 : vector<4x256xf32>, i32 -> vector<4x256xf32>
    %45 = vector.broadcast %3 : vector<1x256xf32> to vector<4x256xf32>
    %46 = arith.mulf %44, %45 : vector<4x256xf32>
    %c56 = arith.constant 56 : index
    %c0_24 = arith.constant 0 : index
    %47 = vector.load %arg7[%c56, %c0_24] : memref<72x256xf32, #tpu.memory_space<vmem>>, vector<4x256xf32>
    tpu.vector_store %arg7[%c56, %c0_24], %46 {strides = array<i32>} : memref<72x256xf32, #tpu.memory_space<vmem>>, vector<4x256xf32>,
    %c239_i32 = arith.constant 239 : i32
    %48 = tpu.dynamic_rotate %1 by %c239_i32 dim 1 : vector<4x256xf32>, i32 -> vector<4x256xf32>
    %49 = arith.mulf %3, %5 : vector<1x256xf32>
    %50 = vector.broadcast %49 : vector<1x256xf32> to vector<4x256xf32>
    %51 = arith.mulf %48, %50 : vector<4x256xf32>
    %c64 = arith.constant 64 : index
    %c0_25 = arith.constant 0 : index
    %52 = vector.load %arg7[%c64, %c0_25] : memref<72x256xf32, #tpu.memory_space<vmem>>, vector<4x256xf32>
    tpu.vector_store %arg7[%c64, %c0_25], %51 {strides = array<i32>} : memref<72x256xf32, #tpu.memory_space<vmem>>, vector<4x256xf32>,
    %c0_26 = arith.constant 0 : index
    %c0_27 = arith.constant 0 : index
    %53 = vector.load %arg4[%c0_26, %c0_27] : memref<4x72xf32, #tpu.memory_space<vmem>>, vector<4x72xf32>
    %c0_28 = arith.constant 0 : index
    %c0_29 = arith.constant 0 : index
    %54 = vector.load %arg7[%c0_28, %c0_29] : memref<72x256xf32, #tpu.memory_space<vmem>>, vector<72x256xf32>
    %cst_30 = arith.constant dense<0.000000e+00> : vector<4x256xf32>
    %55 = tpu.matmul %53, %54, %cst_30 {dimension_numbers = #tpu.dot_dimension_numbers<[1], [0], [0], [1], [0, 0, 1, 1], [], []>} : vector<4x72xf32>, vector<72x256xf32>, vector<4x256xf32> -> vector<4x256xf32>
    %c0_31 = arith.constant 0 : index
    %c0_32 = arith.constant 0 : index
    %56 = vector.load %arg5[%c0_31, %c0_32] : memref<4x1xf32, #tpu.memory_space<vmem>>, vector<4x1xf32>
    %57 = vector.broadcast %56 : vector<4x1xf32> to vector<4x256xf32>
    %58 = arith.addf %55, %57 : vector<4x256xf32>
    %c0_33 = arith.constant 0 : index
    %59 = memref.load %arg1[%c0_33] : memref<1xf32, #tpu.memory_space<smem>>
    %cst_34 = arith.constant 0.000000e+00 : f32
    %60 = vector.broadcast %cst_34 : f32 to vector<4x256xf32>
    %61 = arith.cmpf ogt, %58, %60 : vector<4x256xf32>
    %62 = vector.broadcast %59 : f32 to vector<4x256xf32>
    %63 = arith.mulf %62, %58 : vector<4x256xf32>
    %64 = arith.select %61, %58, %63 : vector<4x256xi1>, vector<4x256xf32>
    %65 = arith.addf %1, %64 : vector<4x256xf32>
    %c0_35 = arith.constant 0 : index
    %c0_36 = arith.constant 0 : index
    %c0_37 = arith.constant 0 : index
    %66 = vector.load %arg6[%c0_35, %c0_36, %c0_37] : memref<1x4x256xf32, #tpu.memory_space<vmem>>, vector<1x4x256xf32>
    %67 = vector.shape_cast %66 : vector<1x4x256xf32> to vector<4x256xf32>
    %68 = vector.shape_cast %65 : vector<4x256xf32> to vector<1x4x256xf32>
    tpu.vector_store %arg6[%c0_35, %c0_36, %c0_37], %68 {strides = array<i32>} : memref<1x4x256xf32, #tpu.memory_space<vmem>>, vector<1x4x256xf32>,
    return
  }
  func.func @transform_0(%arg0: i32) -> i32 {
    %c0_i32 = arith.constant 0 : i32
    %c0_i32_0 = arith.constant 0 : i32
    return %c0_i32 : i32
  }
  func.func @transform_1(%arg0: i32) -> (i32, i32) {
    %c0_i32 = arith.constant 0 : i32
    %c0_i32_0 = arith.constant 0 : i32
    %c0_i32_1 = arith.constant 0 : i32
    return %c0_i32, %c0_i32_0 : i32, i32
  }
  func.func @transform_2(%arg0: i32) -> (i32, i32, i32) {
    %c0_i32 = arith.constant 0 : i32
    %c0_i32_0 = arith.constant 0 : i32
    %c0_i32_1 = arith.constant 0 : i32
    return %arg0, %c0_i32, %c0_i32_0 : i32, i32, i32
  }
  func.func @transform_3(%arg0: i32) -> (i32, i32) {
    %c0_i32 = arith.constant 0 : i32
    %c0_i32_0 = arith.constant 0 : i32
    %c0_i32_1 = arith.constant 0 : i32
    return %c0_i32, %c0_i32_0 : i32, i32
  }
  func.func @transform_4(%arg0: i32) -> (i32, i32) {
    %c0_i32 = arith.constant 0 : i32
    %c0_i32_0 = arith.constant 0 : i32
    %c0_i32_1 = arith.constant 0 : i32
    return %c0_i32, %c0_i32_0 : i32, i32
  }
  func.func @transform_5(%arg0: i32) -> (i32, i32, i32) {
    %c0_i32 = arith.constant 0 : i32
    %c0_i32_0 = arith.constant 0 : i32
    %c0_i32_1 = arith.constant 0 : i32
    return %arg0, %c0_i32, %c0_i32_0 : i32, i32, i32
  }
}

</mosaic_0001>

<llo_original>
// kernel: tpu_custom_call.1
$region0: #{tpu_custom_call.1}
  #allocation0 [shape = 'u32[]', space=smem, size = 0x4, offset = 0x4, fixed_abs, tag = 'smem constant byte address 0x4 - core index']
  #allocation1 [shape = 'u32[72,128]{1,0:T(1,128)}', space=vmem, size = 0x9000, scoped, tag = 'internal scratch']
  #allocation2 [shape = 'f32[72,256]{1,0:T(8,128)}', space=vmem, size = 0x12000, scoped, tag = 'scratch operand']
  #allocation3 [shape = 'f32[1]{0:T(128)S(6)}', space=smem, size = 0x200, scoped, tag = 'scoped memory for tpu_custom_call.1']
  %s0 = inlined_call_operand.<no memory space> [shape: f32[1], index: 0, kind: input, shape index: {}]
  %s1 = inlined_call_operand.hbm [shape: f32[4,256], index: 1, kind: input, shape index: {}]
  %s2 = inlined_call_operand.hbm [shape: f32[2,4,256], index: 2, kind: input, shape index: {}]
  %s3 = inlined_call_operand.vmem [shape: f32[4,72], index: 3, kind: input, shape index: {}]
  %s4 = inlined_call_operand.vmem [shape: f32[4,1], index: 4, kind: input, shape index: {}]
  %s5 = inlined_call_operand.hbm [shape: f32[2,4,256], index: 5, kind: output, shape index: {}]
  %s6 = sld [smem:[#allocation0]]
  $region61: #{tpu_custom_call.1} parent=0
    _
  %s8 = ssub.s32 1, %s6
  %s9 = scalar_select 0, %s8, %s6
  %10 = sst [smem:[#allocation3]] %s0
  $region1: #{tpu_custom_call.1} parent=0
    #allocation4 [shape = 'u8[4096]{0}', space=vmem, size = 0x1000, scoped, tag = 'input window, operand 1, single buffered']
    #allocation5 [shape = 's32[2]{0}', space=sflag, size = 0x8, scoped, tag = 'scoped memory for tpu_custom_call.1']
    #allocation6 [shape = 's32[2]{0}', space=sflag, size = 0x8, scoped, tag = 'scoped memory for tpu_custom_call.1']
    #allocation7 [shape = 'u8[8192]{0}', space=vmem, size = 0x2000, scoped, tag = 'input window, operand 2']
    #allocation8 [shape = 's32[2]{0}', space=sflag, size = 0x8, scoped, tag = 'scoped memory for tpu_custom_call.1']
    #allocation9 [shape = 'u8[8192]{0}', space=vmem, size = 0x2000, scoped, tag = 'output window, operand 0']
    %11 = vsyncpa [#allocation5], 0
    %12 = vsyncpa [#allocation8], 0
    %s13 = scalar_lea.sflag [#allocation8], 1
    %14 = vsyncpa %s13, 0
    %15 = vsyncpa [#allocation6], 0
    %s16 = scalar_lea.sflag [#allocation6], 1
    %17 = vsyncpa %s16, 0
    loop: start=0, step=1, limit=4
    $region2: #{tpu_custom_call.1} parent=1 // loop_pre_header
      _
    $region3: #{tpu_custom_call.1} parent=1 // loop_header
      %s19 = sphi 0, %s23
      %p20 = scmp.ge.s32.totalorder %s19, 4
      %s27 = sphi 0, %s27
      %s29 = sphi 0, %s27
      %s30 = sphi 0, %s29
      %s44 = sphi 0, %s30
      %s48 = sphi 0, %s48
      %s50 = sphi 0, %s48
      %s51 = sphi 0, %s50
      %s65 = sphi 0, %s51
      %s71 = sphi 0, %s73
      %s74 = sphi 0, %s71
      %s75 = sphi 0, %s74
      %s91 = sphi 0, %s75
      %s95 = sphi 0, %s95
      %s97 = sphi 0, %s95
      %s98 = sphi 0, %s97
      %s112 = sphi 0, %s98
      %s116 = sphi 0, %s116
      %s118 = sphi 0, %s116
      %s119 = sphi 0, %s118
      %s133 = sphi 0, %s119
      %s139 = sphi 0, %s141
      %s142 = sphi 0, %s139
      %s143 = sphi 0, %s142
      %s159 = sphi 0, %s143
    $region4: #{tpu_custom_call.1} parent=1 // loop_header_branch
      %22 = sbr.rel (%p20) target = $region8
    $region5: #{tpu_custom_call.1} parent=1 // loop_body
      %s24 = ssub.s32 %s19, 1
      %s25 = ssub.s32 %s19, 2
      %s26 = sadd.s32 %s19, 1
      %s28 = sadd.s32 %s27, 1
      %p31 = scmp.eq.s32.totalorder %s19, 1
      %p32 = scmp.ne.s32.totalorder %s27, %s29
      %p33 = scmp.eq.s32.totalorder %s19, 0
      %p34 = por %p32, %p33
      %p35 = scmp.ne.s32.totalorder %s27, %s29
      %p36 = scmp.eq.s32.totalorder %s24, 1
      %p37 = por %p35, %p36
      %p38 = scmp.ne.s32.totalorder %s29, %s30
      %p39 = scmp.eq.s32.totalorder %s24, 0
      %p40 = por %p38, %p39
      %p41 = scmp.ne.s32.totalorder %s29, %s30
      %p42 = scmp.eq.s32.totalorder %s25, 1
      %p43 = por %p41, %p42
      %p45 = scmp.ne.s32.totalorder %s30, %s44
      %p46 = scmp.eq.s32.totalorder %s25, 0
      %p47 = por %p45, %p46
      %s49 = sadd.s32 %s48, 1
      %p52 = scmp.eq.s32.totalorder %s19, 1
      %p53 = scmp.ne.s32.totalorder %s48, %s50
      %p54 = scmp.eq.s32.totalorder %s19, 0
      %p55 = por %p53, %p54
      %p56 = scmp.ne.s32.totalorder %s48, %s50
      %p57 = scmp.eq.s32.totalorder %s24, 1
      %p58 = por %p56, %p57
      %p59 = scmp.ne.s32.totalorder %s50, %s51
      %p60 = scmp.eq.s32.totalorder %s24, 0
      %p61 = por %p59, %p60
      %p62 = scmp.ne.s32.totalorder %s50, %s51
      %p63 = scmp.eq.s32.totalorder %s25, 1
      %p64 = por %p62, %p63
      %p66 = scmp.ne.s32.totalorder %s51, %s65
      %p67 = scmp.eq.s32.totalorder %s25, 0
      %p68 = por %p66, %p67
      %s69 = ssub.s32 %s19, %s26
      %p70 = scmp.eq.s32.totalorder %s69, 0
      %s72 = sadd.s32 %s71, 1
      %s73 = scalar_select %p70, %s71, %s72
      %p76 = pneg %p70
      %p77 = scmp.eq.s32.totalorder %s19, 1
      %p78 = por %p76, %p77
      %p79 = scmp.ne.s32.totalorder %s71, %s74
      %p80 = scmp.eq.s32.totalorder %s19, 0
      %p81 = por %p79, %p80
      %p82 = scmp.ne.s32.totalorder %s71, %s74
      %p83 = scmp.eq.s32.totalorder %s24, 1
      %p84 = por %p82, %p83
      %p85 = scmp.ne.s32.totalorder %s74, %s75
      %p86 = scmp.eq.s32.totalorder %s24, 0
      %p87 = por %p85, %p86
      %p88 = scmp.ne.s32.totalorder %s74, %s75
      %p89 = scmp.eq.s32.totalorder %s25, 1
      %p90 = por %p88, %p89
      %p92 = scmp.ne.s32.totalorder %s75, %s91
      %p93 = scmp.eq.s32.totalorder %s25, 0
      %p94 = por %p92, %p93
      %s96 = sadd.s32 %s95, 1
      %p99 = scmp.eq.s32.totalorder %s19, 1
      %p100 = scmp.ne.s32.totalorder %s95, %s97
      %p101 = scmp.eq.s32.totalorder %s19, 0
      %p102 = por %p100, %p101
      %p103 = scmp.ne.s32.totalorder %s95, %s97
      %p104 = scmp.eq.s32.totalorder %s24, 1
      %p105 = por %p103, %p104
      %p106 = scmp.ne.s32.totalorder %s97, %s98
      %p107 = scmp.eq.s32.totalorder %s24, 0
      %p108 = por %p106, %p107
      %p109 = scmp.ne.s32.totalorder %s97, %s98
      %p110 = scmp.eq.s32.totalorder %s25, 1
      %p111 = por %p109, %p110
      %p113 = scmp.ne.s32.totalorder %s98, %s112
      %p114 = scmp.eq.s32.totalorder %s25, 0
      %p115 = por %p113, %p114
      %s117 = sadd.s32 %s116, 1
      %p120 = scmp.eq.s32.totalorder %s19, 1
      %p121 = scmp.ne.s32.totalorder %s116, %s118
      %p122 = scmp.eq.s32.totalorder %s19, 0
      %p123 = por %p121, %p122
      %p124 = scmp.ne.s32.totalorder %s116, %s118
      %p125 = scmp.eq.s32.totalorder %s24, 1
      %p126 = por %p124, %p125
      %p127 = scmp.ne.s32.totalorder %s118, %s119
      %p128 = scmp.eq.s32.totalorder %s24, 0
      %p129 = por %p127, %p128
      %p130 = scmp.ne.s32.totalorder %s118, %s119
      %p131 = scmp.eq.s32.totalorder %s25, 1
      %p132 = por %p130, %p131
      %p134 = scmp.ne.s32.totalorder %s119, %s133
      %p135 = scmp.eq.s32.totalorder %s25, 0
      %p136 = por %p134, %p135
      %s137 = ssub.s32 %s19, %s26
      %p138 = scmp.eq.s32.totalorder %s137, 0
      %s140 = sadd.s32 %s139, 1
      %s141 = scalar_select %p138, %s139, %s140
      %p144 = pneg %p138
      %p145 = scmp.eq.s32.totalorder %s19, 1
      %p146 = por %p144, %p145
      %p147 = scmp.ne.s32.totalorder %s139, %s142
      %p148 = scmp.eq.s32.totalorder %s19, 0
      %p149 = por %p147, %p148
      %p150 = scmp.ne.s32.totalorder %s139, %s142
      %p151 = scmp.eq.s32.totalorder %s24, 1
      %p152 = por %p150, %p151
      %p153 = scmp.ne.s32.totalorder %s142, %s143
      %p154 = scmp.eq.s32.totalorder %s24, 0
      %p155 = por %p153, %p154
      %p156 = scmp.ne.s32.totalorder %s142, %s143
      %p157 = scmp.eq.s32.totalorder %s25, 1
      %p158 = por %p156, %p157
      %p160 = scmp.ne.s32.totalorder %s143, %s159
      %p161 = scmp.eq.s32.totalorder %s25, 0
      %p162 = por %p160, %p161
      %p163 = scmp.le.s32.totalorder 1, %s19
      %p164 = scmp.lt.s32.totalorder %s19, 3
      %p165 = pnand %p163, %p164
      %p166 = pneg %p165
      // Predicated region
      $region9: #{tpu_custom_call.1} parent=5 // pred_check
        _
      $region10: #{tpu_custom_call.1} parent=5 // pred_check_branch
        %168 = sbr.rel (%p165) target = $region12
      $region11: #{tpu_custom_call.1} parent=5 // pred_region
        %s169 = ssub.s32 %s19, 1
        // Predicated region
        $region13: #{tpu_custom_call.1} parent=11 // pred_check
          %p170 = pneg %p40
        $region14: #{tpu_custom_call.1} parent=11 // pred_check_branch
          %172 = sbr.rel (%p170) target = $region16
        $region15: #{tpu_custom_call.1} parent=11 // pred_region
          _
        $region16: #{tpu_custom_call.1} parent=11 // pred_fallthru
          _
        // Predicated region
        $region17: #{tpu_custom_call.1} parent=11 // pred_check
          %p173 = pneg %p61
        $region18: #{tpu_custom_call.1} parent=11 // pred_check_branch
          %175 = sbr.rel (%p173) target = $region20
        $region19: #{tpu_custom_call.1} parent=11 // pred_region
          %177 = vsyncadd [#allocation5], 0
          %s179 = sshll.u32 %s1, 4
          %s180 = int_to_ptr.hbm [resolvable:$true] %s179
          %s181 = sshll.u32 [#allocation4], 4
          %s182 = int_to_ptr.vmem [resolvable:$true] %s181
          %184 = dma.hbm_to_vmem [thread:$0]  %s180, 128, %s182, [#allocation5]
        $region20: #{tpu_custom_call.1} parent=11 // pred_fallthru
          _
        // Predicated region
        $region21: #{tpu_custom_call.1} parent=11 // pred_check
          %p185 = pneg %p108
        $region22: #{tpu_custom_call.1} parent=11 // pred_check_branch
          %187 = sbr.rel (%p185) target = $region24
        $region23: #{tpu_custom_call.1} parent=11 // pred_region
          _
        $region24: #{tpu_custom_call.1} parent=11 // pred_fallthru
          _
        // Predicated region
        $region25: #{tpu_custom_call.1} parent=11 // pred_check
          %p188 = pneg %p129
        $region26: #{tpu_custom_call.1} parent=11 // pred_check_branch
          %190 = sbr.rel (%p188) target = $region28
        $region27: #{tpu_custom_call.1} parent=11 // pred_region
          _
        $region28: #{tpu_custom_call.1} parent=11 // pred_fallthru
          _
      $region12: #{tpu_custom_call.1} parent=5 // pred_fallthru
        _
      %p191 = scmp.lt.s32.totalorder %s19, 2
      // Predicated region
      $region29: #{tpu_custom_call.1} parent=5 // pred_check
        %p192 = pneg %p191
      $region30: #{tpu_custom_call.1} parent=5 // pred_check_branch
        %194 = sbr.rel (%p192) target = $region32
      $region31: #{tpu_custom_call.1} parent=5 // pred_region
        // Predicated region
        $region33: #{tpu_custom_call.1} parent=31 // pred_check
          %p195 = pneg %p81
        $region34: #{tpu_custom_call.1} parent=31 // pred_check_branch
          %197 = sbr.rel (%p195) target = $region36
        $region35: #{tpu_custom_call.1} parent=31 // pred_region
          %s198 = sand.u32 %s71, 1
          %s199 = scalar_lea.sflag [#allocation8], %s198
          %s200 = sand.u32 %s71, 1
          %s201 = smul.addr %s200, 8
          %s202 = scalar_lea.vmem [#allocation7], %s201
          %204 = vsyncadd %s199, 0
          %s205 = smul.addr %s19, 2
          %s206 = smul.addr %s205, 4
          %s207 = scalar_lea.hbm %s2, %s206
          %s209 = sshll.u32 %s207, 4
          %s210 = int_to_ptr.hbm [resolvable:$true] %s209
          %s211 = sshll.u32 %s202, 4
          %s212 = int_to_ptr.vmem [resolvable:$true] %s211
          %214 = dma.hbm_to_vmem [thread:$0]  %s210, 128, %s212, %s199
        $region36: #{tpu_custom_call.1} parent=31 // pred_fallthru
          _
      $region32: #{tpu_custom_call.1} parent=5 // pred_fallthru
        _
      %p215 = scmp.le.s32.totalorder 1, %s19
      %p216 = scmp.lt.s32.totalorder %s19, 3
      %p217 = pnand %p215, %p216
      %p218 = pneg %p217
      // Predicated region
      $region37: #{tpu_custom_call.1} parent=5 // pred_check
        _
      $region38: #{tpu_custom_call.1} parent=5 // pred_check_branch
        %220 = sbr.rel (%p217) target = $region40
      $region39: #{tpu_custom_call.1} parent=5 // pred_region
        %s221 = ssub.s32 %s19, 1
        // Predicated region
        $region41: #{tpu_custom_call.1} parent=39 // pred_check
          %p222 = pneg %p61
        $region42: #{tpu_custom_call.1} parent=39 // pred_check_branch
          %224 = sbr.rel (%p222) target = $region44
        $region43: #{tpu_custom_call.1} parent=39 // pred_region
          %226 = dma.done [#allocation5], 128
        $region44: #{tpu_custom_call.1} parent=39 // pred_fallthru
          _
        %s227 = sand.u32 %s74, 1
        %s228 = scalar_lea.sflag [#allocation8], %s227
        %s229 = sand.u32 %s74, 1
        %s230 = smul.addr %s229, 8
        %s231 = scalar_lea.vmem [#allocation7], %s230
        // Predicated region
        $region45: #{tpu_custom_call.1} parent=39 // pred_check
          %p232 = pneg %p87
        $region46: #{tpu_custom_call.1} parent=39 // pred_check_branch
          %234 = sbr.rel (%p232) target = $region48
        $region47: #{tpu_custom_call.1} parent=39 // pred_region
          %236 = dma.done %s228, 128
        $region48: #{tpu_custom_call.1} parent=39 // pred_fallthru
          _
        %p237 = pneg %p40
        %p238 = pneg %p37
        %p239 = pneg %p61
        %p240 = pneg %p58
        %s241 = sand.u32 %s74, 1
        %s242 = scalar_lea.sflag [#allocation8], %s241
        %s243 = sand.u32 %s74, 1
        %s244 = smul.addr %s243, 8
        %s245 = scalar_lea.vmem [#allocation7], %s244
        %p246 = pneg %p87
        %p247 = pneg %p84
        %p248 = pneg %p108
        %p249 = pneg %p105
        %p250 = pneg %p129
        %p251 = pneg %p126
        %p252 = pneg %p155
        %p253 = pneg %p152
        %s254 = sand.u32 %s142, 1
        %s255 = scalar_lea.sflag [#allocation6], %s254
        %s256 = sand.u32 %s142, 1
        %s257 = smul.addr %s256, 8
        %s258 = scalar_lea.vmem [#allocation9], %s257
        %v259 = vld [vmem:[%s231] sm:$0xff]
        %v260 = vld [vmem:[#allocation4] ss:$4 sm:$0x3]
        %s261 = scalar_lea.vmem [#allocation4], 1
        %v262 = vld [vmem:[%s261] ss:$4 sm:$0x3]
        %s263 = scalar_lea.vmem [#allocation4], 2
        %v264 = vld [vmem:[%s263] ss:$4 sm:$0x3]
        %s265 = scalar_lea.vmem [#allocation4], 3
        %v266 = vld [vmem:[%s265] ss:$4 sm:$0x3]
        %267 = vst [vmem:[#allocation2] sm:$0xf0] 0.0
        %268 = vst [vmem:[#allocation2 + $0x8] sm:$0xf0] 0.0
        %269 = vst [vmem:[#allocation2 + $0x10] sm:$0xf0] 0.0
        %270 = vst [vmem:[#allocation2 + $0x18] sm:$0xf0] 0.0
        %271 = vst [vmem:[#allocation2 + $0x20] sm:$0xf0] 0.0
        %272 = vst [vmem:[#allocation2 + $0x28] sm:$0xf0] 0.0
        %273 = vst [vmem:[#allocation2 + $0x30] sm:$0xf0] 0.0
        %274 = vst [vmem:[#allocation2 + $0x38] sm:$0xf0] 0.0
        %275 = vst [vmem:[#allocation2 + $0x40] sm:$0xf0] 0.0
        %276 = vst [vmem:[#allocation2 + $0x48] sm:$0xf0] 0.0
        %277 = vst [vmem:[#allocation2 + $0x50] sm:$0xf0] 0.0
        %278 = vst [vmem:[#allocation2 + $0x58] sm:$0xf0] 0.0
        %279 = vst [vmem:[#allocation2 + $0x60] sm:$0xf0] 0.0
        %280 = vst [vmem:[#allocation2 + $0x68] sm:$0xf0] 0.0
        %281 = vst [vmem:[#allocation2 + $0x70] sm:$0xf0] 0.0
        %282 = vst [vmem:[#allocation2 + $0x78] sm:$0xf0] 0.0
        %283 = vst [vmem:[#allocation2 + $0x80] sm:$0xf0] 0.0
        %284 = vst [vmem:[#allocation2 + $0x88] sm:$0xf0] 0.0
        %286 = vst [vmem:[#allocation1] ss:$2 sm:$0xff] %v259
        %v287 = vld.sshfl [vmem:[#allocation1] sm:$0xff pattern:$0x75316420]
        %v288 = vld.sshfl [vmem:[#allocation1 + $0x8] sm:$0xff pattern:$0x75316420]
        %291 = vrot.lane.b32.xlu0 %v287, 17
        %v292 = vpop.permute.xlu0 %291
        %293 = vrot.lane.b32.xlu0 %v288, 17
        %v294 = vpop.permute.xlu0 %293
        %v295 = vlaneseq
        %v296 = vand.u32 %v295, 127
        %vm297 = vcmp.lt.s32.totalorder %v296, 17
        %v298 = vsel %vm297, %v292, %v294
        %v299 = vsel %vm297, %v294, %v292
        %v300 = vmul.f32 %v260, %v264
        %v302 = vperm.slane %v300, 0
        %v303 = vperm.slane %v300, 1
        %v306 = vmul.f32 %v299, %v302
        %v307 = vmul.f32 %v298, %v303
        %308 = vst [vmem:[#allocation2] sm:$0xf] %v306
        %309 = vst [vmem:[#allocation2 + $0x8] sm:$0xf] %v307
        %310 = vst [vmem:[#allocation1] ss:$2 sm:$0xff] %v259
        %v311 = vld.sshfl [vmem:[#allocation1] sm:$0xff pattern:$0x75316420]
        %v312 = vld.sshfl [vmem:[#allocation1 + $0x8] sm:$0xff pattern:$0x75316420]
        %315 = vrot.lane.b32.xlu0 %v311, 16
        %v316 = vpop.permute.xlu0 %315
        %317 = vrot.lane.b32.xlu0 %v312, 16
        %v318 = vpop.permute.xlu0 %317
        %vm319 = vcmp.lt.s32.totalorder %v296, 16
        %v320 = vsel %vm319, %v316, %v318
        %v321 = vsel %vm319, %v318, %v316
        %v323 = vperm.slane %v260, 0
        %v324 = vperm.slane %v260, 1
        %v327 = vmul.f32 %v321, %v323
        %v328 = vmul.f32 %v320, %v324
        %329 = vst [vmem:[#allocation2 + $0x10] sm:$0xf] %v327
        %330 = vst [vmem:[#allocation2 + $0x18] sm:$0xf] %v328
        %331 = vst [vmem:[#allocation1] ss:$2 sm:$0xff] %v259
        %v332 = vld.sshfl [vmem:[#allocation1] sm:$0xff pattern:$0x75316420]
        %v333 = vld.sshfl [vmem:[#allocation1 + $0x8] sm:$0xff pattern:$0x75316420]
        %336 = vrot.lane.b32.xlu0 %v332, 15
        %v337 = vpop.permute.xlu0 %336
        %338 = vrot.lane.b32.xlu0 %v333, 15
        %v339 = vpop.permute.xlu0 %338
        %vm340 = vcmp.lt.s32.totalorder %v296, 15
        %v341 = vsel %vm340, %v337, %v339
        %v342 = vsel %vm340, %v339, %v337
        %v343 = vmul.f32 %v260, %v266
        %v345 = vperm.slane %v343, 0
        %v346 = vperm.slane %v343, 1
        %v349 = vmul.f32 %v342, %v345
        %v350 = vmul.f32 %v341, %v346
        %351 = vst [vmem:[#allocation2 + $0x20] sm:$0xf] %v349
        %352 = vst [vmem:[#allocation2 + $0x28] sm:$0xf] %v350
        %353 = vst [vmem:[#allocation1] ss:$2 sm:$0xff] %v259
        %v354 = vld.sshfl [vmem:[#allocation1] sm:$0xff pattern:$0x75316420]
        %v355 = vld.sshfl [vmem:[#allocation1 + $0x8] sm:$0xff pattern:$0x75316420]
        %358 = vrot.lane.b32.xlu0 %v354, 1
        %v359 = vpop.permute.xlu0 %358
        %360 = vrot.lane.b32.xlu0 %v355, 1
        %v361 = vpop.permute.xlu0 %360
        %vm362 = vcmp.lt.s32.totalorder %v296, 1
        %v363 = vsel %vm362, %v359, %v361
        %v364 = vsel %vm362, %v361, %v359
        %v366 = vperm.slane %v264, 0
        %v367 = vperm.slane %v264, 1
        %v370 = vmul.f32 %v364, %v366
        %v371 = vmul.f32 %v363, %v367
        %372 = vst [vmem:[#allocation2 + $0x30] sm:$0xf] %v370
        %373 = vst [vmem:[#allocation2 + $0x38] sm:$0xf] %v371
        %374 = vst [vmem:[#allocation1] ss:$2 sm:$0xff] %v259
        %v375 = vld.sshfl [vmem:[#allocation1] sm:$0xff pattern:$0x75316420]
        %v376 = vld.sshfl [vmem:[#allocation1 + $0x8] sm:$0xff pattern:$0x75316420]
        %379 = vst [vmem:[#allocation2 + $0x40] sm:$0xf] %v375
        %380 = vst [vmem:[#allocation2 + $0x48] sm:$0xf] %v376
        %381 = vst [vmem:[#allocation1] ss:$2 sm:$0xff] %v259
        %v382 = vld.sshfl [vmem:[#allocation1] sm:$0xff pattern:$0x75316420]
        %v383 = vld.sshfl [vmem:[#allocation1 + $0x8] sm:$0xff pattern:$0x75316420]
        %386 = vrot.lane.b32.xlu0 %v382, 127
        %v387 = vpop.permute.xlu0 %386
        %388 = vrot.lane.b32.xlu0 %v383, 127
        %v389 = vpop.permute.xlu0 %388
        %vm390 = vcmp.lt.s32.totalorder %v296, 127
        %v391 = vsel %vm390, %v387, %v389
        %v392 = vsel %vm390, %v389, %v387
        %v394 = vperm.slane %v266, 0
        %v395 = vperm.slane %v266, 1
        %v398 = vmul.f32 %v391, %v394
        %v399 = vmul.f32 %v392, %v395
        %400 = vst [vmem:[#allocation2 + $0x50] sm:$0xf] %v398
        %401 = vst [vmem:[#allocation2 + $0x58] sm:$0xf] %v399
        %402 = vst [vmem:[#allocation1] ss:$2 sm:$0xff] %v259
        %v403 = vld.sshfl [vmem:[#allocation1] sm:$0xff pattern:$0x75316420]
        %v404 = vld.sshfl [vmem:[#allocation1 + $0x8] sm:$0xff pattern:$0x75316420]
        %407 = vrot.lane.b32.xlu0 %v403, 113
        %v408 = vpop.permute.xlu0 %407
        %409 = vrot.lane.b32.xlu0 %v404, 113
        %v410 = vpop.permute.xlu0 %409
        %vm411 = vcmp.lt.s32.totalorder %v296, 113
        %v412 = vsel %vm411, %v408, %v410
        %v413 = vsel %vm411, %v410, %v408
        %v414 = vmul.f32 %v262, %v264
        %v416 = vperm.slane %v414, 0
        %v417 = vperm.slane %v414, 1
        %v420 = vmul.f32 %v412, %v416
        %v421 = vmul.f32 %v413, %v417
        %422 = vst [vmem:[#allocation2 + $0x60] sm:$0xf] %v420
        %423 = vst [vmem:[#allocation2 + $0x68] sm:$0xf] %v421
        %424 = vst [vmem:[#allocation1] ss:$2 sm:$0xff] %v259
        %v425 = vld.sshfl [vmem:[#allocation1] sm:$0xff pattern:$0x75316420]
        %v426 = vld.sshfl [vmem:[#allocation1 + $0x8] sm:$0xff pattern:$0x75316420]
        %429 = vrot.lane.b32.xlu0 %v425, 112
        %v430 = vpop.permute.xlu0 %429
        %431 = vrot.lane.b32.xlu0 %v426, 112
        %v432 = vpop.permute.xlu0 %431
        %vm433 = vcmp.lt.s32.totalorder %v296, 112
        %v434 = vsel %vm433, %v430, %v432
        %v435 = vsel %vm433, %v432, %v430
        %v437 = vperm.slane %v262, 0
        %v438 = vperm.slane %v262, 1
        %v441 = vmul.f32 %v434, %v437
        %v442 = vmul.f32 %v435, %v438
        %443 = vst [vmem:[#allocation2 + $0x70] sm:$0xf] %v441
        %444 = vst [vmem:[#allocation2 + $0x78] sm:$0xf] %v442
        %445 = vst [vmem:[#allocation1] ss:$2 sm:$0xff] %v259
        %v446 = vld.sshfl [vmem:[#allocation1] sm:$0xff pattern:$0x75316420]
        %v447 = vld.sshfl [vmem:[#allocation1 + $0x8] sm:$0xff pattern:$0x75316420]
        %450 = vrot.lane.b32.xlu0 %v446, 111
        %v451 = vpop.permute.xlu0 %450
        %452 = vrot.lane.b32.xlu0 %v447, 111
        %v453 = vpop.permute.xlu0 %452
        %vm454 = vcmp.lt.s32.totalorder %v296, 111
        %v455 = vsel %vm454, %v451, %v453
        %v456 = vsel %vm454, %v453, %v451
        %v457 = vmul.f32 %v262, %v266
        %v459 = vperm.slane %v457, 0
        %v460 = vperm.slane %v457, 1
        %v463 = vmul.f32 %v455, %v459
        %v464 = vmul.f32 %v456, %v460
        %465 = vst [vmem:[#allocation2 + $0x80] sm:$0xf] %v463
        %466 = vst [vmem:[#allocation2 + $0x88] sm:$0xf] %v464
        %v467 = vld [vmem:[%s3] sm:$0xf]
        %v468 = vld [vmem:[#allocation2] sm:$0xff]
        %v469 = vld [vmem:[#allocation2 + $0x8] sm:$0xff]
        %v470 = vld [vmem:[#allocation2 + $0x10] sm:$0xff]
        %v471 = vld [vmem:[#allocation2 + $0x18] sm:$0xff]
        %v472 = vld [vmem:[#allocation2 + $0x20] sm:$0xff]
        %v473 = vld [vmem:[#allocation2 + $0x28] sm:$0xff]
        %v474 = vld [vmem:[#allocation2 + $0x30] sm:$0xff]
        %v475 = vld [vmem:[#allocation2 + $0x38] sm:$0xff]
        %v476 = vld [vmem:[#allocation2 + $0x40] sm:$0xff]
        %v477 = vld [vmem:[#allocation2 + $0x48] sm:$0xff]
        %v478 = vld [vmem:[#allocation2 + $0x50] sm:$0xff]
        %v479 = vld [vmem:[#allocation2 + $0x58] sm:$0xff]
        %v480 = vld [vmem:[#allocation2 + $0x60] sm:$0xff]
        %v481 = vld [vmem:[#allocation2 + $0x68] sm:$0xff]
        %v482 = vld [vmem:[#allocation2 + $0x70] sm:$0xff]
        %v483 = vld [vmem:[#allocation2 + $0x78] sm:$0xff]
        %v484 = vld [vmem:[#allocation2 + $0x80] sm:$0xff]
        %v485 = vld [vmem:[#allocation2 + $0x88] sm:$0xff]
        %v486 = vld [vmem:[%s4] sm:$0xf]
        %488 = vset.pattern.permute.xlu0 0
        %489 = vperm.xlu0 %488, %v486
        %v490 = vpop.permute.xlu0 %489
        %vm492 = vcmask 588800
        %v494 = vsel %vm492, %v467, 0
        %496 = vmatpush.msra.mxu0 0.0
        %497 = vmatpush.msra.mxu0 0.0
        %498 = vmatpush.msra.mxu0 0.0
        %499 = vmatpush.msra.mxu0 0.0
        %500 = vmatpush.msra.mxu0 0.0
        %501 = vmatpush.msra.mxu0 0.0
        %502 = vmatpush.msra.mxu0 0.0
        %503 = vmatpush.msra.mxu0 %v484
        %504 = vmatpush.msra.mxu0 %v482
        %505 = vmatpush.msra.mxu0 %v480
        %506 = vmatpush.msra.mxu0 %v478
        %507 = vmatpush.msra.mxu0 %v476
        %508 = vmatpush.msra.mxu0 %v474
        %509 = vmatpush.msra.mxu0 %v472
        %510 = vmatpush.msra.mxu0 %v470
        %511 = vmatpush.msra.mxu0 %v468
        %512 = vmatmul.f32.gmra.mxu0 %v494
        %v513 = vpop.f32.mrf.mxu0
        %v514 = vadd.f32 %v490, %v513
        %515 = vdwg.mxu0
        %516 = vmatpush.msra.mxu0 0.0
        %517 = vmatpush.msra.mxu0 0.0
        %518 = vmatpush.msra.mxu0 0.0
        %519 = vmatpush.msra.mxu0 0.0
        %520 = vmatpush.msra.mxu0 0.0
        %521 = vmatpush.msra.mxu0 0.0
        %522 = vmatpush.msra.mxu0 0.0
        %523 = vmatpush.msra.mxu0 %v485
        %524 = vmatpush.msra.mxu0 %v483
        %525 = vmatpush.msra.mxu0 %v481
        %526 = vmatpush.msra.mxu0 %v479
        %527 = vmatpush.msra.mxu0 %v477
        %528 = vmatpush.msra.mxu0 %v475
        %529 = vmatpush.msra.mxu0 %v473
        %530 = vmatpush.msra.mxu0 %v471
        %531 = vmatpush.msra.mxu0 %v469
        %532 = vmatmul.f32.gmra.mxu0 %v494
        %v533 = vpop.f32.mrf.mxu0
        %v534 = vadd.f32 %v490, %v533
        %535 = vdwg.mxu0
        %s536 = sld [smem:[#allocation3]]
        %vm537 = vcmp.gt.f32.partialorder %v514, 0.0
        %vm538 = vcmp.gt.f32.partialorder %v534, 0.0
        %v539 = vstv %s536
        %v540 = vmul.f32 %v539, %v514
        %v541 = vmul.f32 %v539, %v534
        %v542 = vsel %vm537, %v514, %v540
        %v543 = vsel %vm538, %v534, %v541
        %v546 = vrot.slane %v543, 4
        %vm547 = vcmask 1043456
        %v548 = vsel %vm547, %v542, %v546
        %v550 = vadd.f32 %v259, %v548
        %551 = vst [vmem:[%s258] sm:$0xff] %v550
        %s552 = sand.u32 %s142, 1
        %s553 = scalar_lea.sflag [#allocation6], %s552
        %s554 = sand.u32 %s142, 1
        %s555 = smul.addr %s554, 8
        %s556 = scalar_lea.vmem [#allocation9], %s555
        // Predicated region
        $region49: #{tpu_custom_call.1} parent=39 // pred_check
          %p557 = pneg %p152
        $region50: #{tpu_custom_call.1} parent=39 // pred_check_branch
          %559 = sbr.rel (%p557) target = $region52
        $region51: #{tpu_custom_call.1} parent=39 // pred_region
          %561 = vsyncadd %s553, 0
          %s562 = smul.addr %s24, 2
          %s563 = smul.addr %s562, 4
          %s564 = scalar_lea.hbm %s5, %s563
          %s566 = sshll.u32 %s556, 4
          %s567 = int_to_ptr.vmem [resolvable:$true] %s566
          %s568 = sshll.u32 %s564, 4
          %s569 = int_to_ptr.hbm [resolvable:$true] %s568
          %571 = dma.vmem_to_hbm [thread:$0]  %s567, 128, %s569, %s553
        $region52: #{tpu_custom_call.1} parent=39 // pred_fallthru
          _
      $region40: #{tpu_custom_call.1} parent=5 // pred_fallthru
        _
      %p572 = scmp.le.s32.totalorder 2, %s19
      // Predicated region
      $region53: #{tpu_custom_call.1} parent=5 // pred_check
        %p573 = pneg %p572
      $region54: #{tpu_custom_call.1} parent=5 // pred_check_branch
        %575 = sbr.rel (%p573) target = $region56
      $region55: #{tpu_custom_call.1} parent=5 // pred_region
        %s576 = ssub.s32 %s19, 2
        // Predicated region
        $region57: #{tpu_custom_call.1} parent=55 // pred_check
          %p577 = pneg %p158
        $region58: #{tpu_custom_call.1} parent=55 // pred_check_branch
          %579 = sbr.rel (%p577) target = $region60
        $region59: #{tpu_custom_call.1} parent=55 // pred_region
          %s580 = sand.u32 %s143, 1
          %s581 = scalar_lea.sflag [#allocation6], %s580
          %s582 = sand.u32 %s143, 1
          %s583 = smul.addr %s582, 8
          %s584 = scalar_lea.vmem [#allocation9], %s583
          %586 = dma.done %s581, 128
        $region60: #{tpu_custom_call.1} parent=55 // pred_fallthru
          _
      $region56: #{tpu_custom_call.1} parent=5 // pred_fallthru
        _
    $region6: #{tpu_custom_call.1} parent=1 // loop_footer
      %s23 = sadd.s32 1, %s19
    $region7: #{tpu_custom_call.1} parent=1 // loop_footer_branch
      %18 = sbr.rel target = $region3
    $region8: #{tpu_custom_call.1} parent=1 // loop_exit
      _
    %587 = vsyncpa [#allocation5], 1
    %s588 = scalar_lea.sflag [#allocation5], 1
    %589 = vsyncpa %s588, 1
    %590 = vsyncpa [#allocation8], 1
    %s591 = scalar_lea.sflag [#allocation8], 1
    %592 = vsyncpa %s591, 1
    %593 = vsyncpa [#allocation6], 1
    %s594 = scalar_lea.sflag [#allocation6], 1
    %595 = vsyncpa %s594, 1

</llo_original>
